<compile_context>
chip_gen: v5e
topology: v5e:2x2
jax: 0.10.0
libtpu: 0.0.40
codegen_flags: <defaults>
</compile_context>

<pallas_src>
import jax
import jax.numpy as jnp
from jax import lax
from jax.experimental import pallas as pl
from jax.experimental.pallas import tpu as pltpu


def gnn_encoder_kernel(adj_ref, x_ref, w1_ref, b1_ref, w2_ref, b2_ref, g_ref):
    """One grid step == a tile of Bb graphs.

    adj_ref: (Bb, N, N) dense adjacency (no self loops; symmetric assumed)
    x_ref:   (Bb, N, F) node features
    g_ref:   (Bb, 1, H) mean-pooled graph representation (output)
    Weight refs have constant index_maps (resident across the grid).
    """
    a = adj_ref[...]                         # (Bb, N, N) f32
    x = x_ref[...]                           # (Bb, N, F) f32
    bb, n, f_in = x.shape
    h_dim = w1_ref.shape[1]

    # GCN normalization without materializing A_hat:
    #   A_hat @ Y = d * (A @ (d*Y) + d*Y),  d = rsqrt(rowsum(A) + 1)
    # rowsum(A+I) == rowsum(A) + 1, and symmetric A => row degree == col degree.
    deg = jnp.sum(a, axis=2, keepdims=True) + 1.0   # (Bb, N, 1)
    d = lax.rsqrt(deg)                              # (Bb, N, 1)
    inv_n = 1.0 / n

    # --- GCN layer 1: H1 = ReLU(A_hat @ (X @ W1) + b1) ---
    # Feature transform flattened to (Bb*N, F) @ (F, H): tall-M MXU matmul.
    xw1 = jnp.dot(x.reshape(bb * n, f_in), w1_ref[...],
                  preferred_element_type=jnp.float32).reshape(bb, n, h_dim)
    y1 = d * xw1
    msg1 = jnp.einsum('bij,bjh->bih', a, y1,
                      preferred_element_type=jnp.float32)
    h1 = jnp.maximum(d * (msg1 + y1) + b1_ref[...], 0.0)

    # --- GCN layer 2: H2 = ReLU(A_hat @ (H1 @ W2) + b2) ---
    hw2 = jnp.dot(h1.reshape(bb * n, h_dim), w2_ref[...],
                  preferred_element_type=jnp.float32).reshape(bb, n, h_dim)
    y2 = d * hw2
    msg2 = jnp.einsum('bij,bjh->bih', a, y2,
                      preferred_element_type=jnp.float32)
    h2 = jnp.maximum(d * (msg2 + y2) + b2_ref[...], 0.0)

    # --- graph readout: mean over nodes -> (Bb, 1, H) ---
    g_ref[...] = jnp.sum(h2, axis=1, keepdims=True) * inv_n


def classifier_kernel(g_ref, wc1_ref, bc1_ref, wc2_ref, bc2_ref, out_ref):
    """Batched MLP classifier: one real [B,H]@[H,H] and [B,H]@[H,C] matmul."""
    g = g_ref[...]                                        # (B, H)
    z = jnp.maximum(
        jnp.dot(g, wc1_ref[...], preferred_element_type=jnp.float32)
        + bc1_ref[...], 0.0)
    out_ref[...] = (jnp.dot(z, wc2_ref[...],
                            preferred_element_type=jnp.float32)
                    + bc2_ref[...])


def gnn_pre_model(adj, x, params, *, graphs_per_step=8):
    B, N, _ = adj.shape
    F_in = x.shape[-1]
    H = params["w1"].shape[1]
    C = params["wc2"].shape[1]

    # Tile of graphs per grid step (must divide B).
    Bb = min(B, graphs_per_step)
    while B % Bb != 0:
        Bb -= 1

    const2d = lambda i: (0, 0)

    # --- GNN encoder: grid over graph tiles, emits pooled reps (B, 1, H) ---
    g = pl.pallas_call(
        gnn_encoder_kernel,
        out_shape=jax.ShapeDtypeStruct((B, 1, H), jnp.float32),
        grid=(B // Bb,),
        in_specs=[
            pl.BlockSpec((Bb, N, N), lambda i: (i, 0, 0)),     # adjacency tile
            pl.BlockSpec((Bb, N, F_in), lambda i: (i, 0, 0)),  # node features
            pl.BlockSpec((F_in, H), const2d),                  # W1 (resident)
            pl.BlockSpec((1, H), const2d),                     # b1
            pl.BlockSpec((H, H), const2d),                     # W2
            pl.BlockSpec((1, H), const2d),                     # b2
        ],
        out_specs=pl.BlockSpec((Bb, 1, H), lambda i: (i, 0, 0)),
        compiler_params=pltpu.CompilerParams(
            dimension_semantics=("parallel",)),   # independent graphs: v7x 2xTC
    )(adj, x, params["w1"], params["b1"], params["w2"], params["b2"])

    g = g.reshape(B, H)

    # --- Classifier: single Pallas call, full arrays resident in VMEM ---
    logits = pl.pallas_call(
        classifier_kernel,
        out_shape=jax.ShapeDtypeStruct((B, C), jnp.float32),
    )(g, params["wc1"], params["bc1"], params["wc2"], params["bc2"])
    return logits


def reference(adj, x, params):
    """Pure-JAX reference of the same forward pass."""
    B, N, _ = adj.shape
    eye = jnp.eye(N, dtype=adj.dtype)[None]
    a_self = adj + eye
    deg = jnp.sum(a_self, axis=-1, keepdims=True)
    d = 1.0 / jnp.sqrt(deg)
    a_hat = d * a_self * jnp.swapaxes(d, -1, -2)
    h1 = jax.nn.relu(a_hat @ (x @ params["w1"]) + params["b1"])
    h2 = jax.nn.relu(a_hat @ (h1 @ params["w2"]) + params["b2"])
    g = jnp.mean(h2, axis=1)
    z = jax.nn.relu(g @ params["wc1"] + params["bc1"])
    return z @ params["wc2"] + params["bc2"]


def init_params(key, f_in, hidden, n_classes):
    ks = jax.random.split(key, 5)
    def glorot(k, shape):
        lim = (6.0 / (shape[0] + shape[1])) ** 0.5
        return jax.random.uniform(k, shape, jnp.float32, -lim, lim)
    return {
        "w1": glorot(ks[0], (f_in, hidden)),
        "b1": jnp.zeros((1, hidden), jnp.float32),
        "w2": glorot(ks[1], (hidden, hidden)),
        "b2": jnp.zeros((1, hidden), jnp.float32),
        "wc1": glorot(ks[2], (hidden, hidden)),
        "bc1": jnp.zeros((1, hidden), jnp.float32),
        "wc2": glorot(ks[3], (hidden, n_classes)),
        "bc2": jnp.zeros((1, n_classes), jnp.float32),
    }


if __name__ == "__main__":
    # Small shapes; B=4 with graphs_per_step=2 exercises a multi-step grid.
    B, N, F_IN, HIDDEN, C = 4, 16, 8, 32, 4
    key = jax.random.PRNGKey(0)
    k_adj, k_x, k_p = jax.random.split(key, 3)

    # Random symmetric binary adjacency (no self loops; kernel adds +1 degree).
    raw = (jax.random.uniform(k_adj, (B, N, N)) > 0.6).astype(jnp.float32)
    adj = jnp.maximum(raw, jnp.swapaxes(raw, -1, -2))
    adj = adj * (1.0 - jnp.eye(N, dtype=jnp.float32)[None])

    x = jax.random.normal(k_x, (B, N, F_IN), jnp.float32)
    params = init_params(k_p, F_IN, HIDDEN, C)

    out = gnn_pre_model(adj, x, params, graphs_per_step=2)
    out = jax.block_until_ready(out)

    ref = reference(adj, x, params)
    assert out.shape == (B, C)
    assert jnp.allclose(out, ref, atol=1e-4, rtol=1e-4), (out, ref)
    print("KERNEL_OK")
</pallas_src>

<mosaic_0001>
module attributes {stable_mosaic.version = 11 : i64} {
  func.func @gnn_encoder_kernel(%arg0: i32, %arg1: memref<2x16x16xf32, #tpu.memory_space<vmem>>, %arg2: memref<2x16x8xf32, #tpu.memory_space<vmem>>, %arg3: memref<8x32xf32, #tpu.memory_space<vmem>>, %arg4: memref<1x32xf32, #tpu.memory_space<vmem>>, %arg5: memref<32x32xf32, #tpu.memory_space<vmem>>, %arg6: memref<1x32xf32, #tpu.memory_space<vmem>>, %arg7: memref<2x1x32xf32, #tpu.memory_space<vmem>>) attributes {dimension_semantics = [#tpu.dimension_semantics<parallel>], iteration_bounds = array<i64: 2>, scalar_prefetch = 0 : i64, scratch_operands = 0 : i64, tpu.core_type = #tpu.core_type<tc>, window_params = [{transform_indices = @transform_0, window_bounds = array<i64: 2, 16, 16>}, {transform_indices = @transform_1, window_bounds = array<i64: 2, 16, 8>}, {pipeline_mode = #tpu.pipeline_mode<synchronous>, transform_indices = @transform_2, window_bounds = array<i64: 8, 32>}, {pipeline_mode = #tpu.pipeline_mode<synchronous>, transform_indices = @transform_3, window_bounds = array<i64: 1, 32>}, {pipeline_mode = #tpu.pipeline_mode<synchronous>, transform_indices = @transform_4, window_bounds = array<i64: 32, 32>}, {pipeline_mode = #tpu.pipeline_mode<synchronous>, transform_indices = @transform_5, window_bounds = array<i64: 1, 32>}, {transform_indices = @transform_6, window_bounds = array<i64: 2, 1, 32>}]} {
    %c0 = arith.constant 0 : index
    %c0_0 = arith.constant 0 : index
    %c0_1 = arith.constant 0 : index
    %0 = vector.load %arg1[%c0, %c0_0, %c0_1] : memref<2x16x16xf32, #tpu.memory_space<vmem>>, vector<2x16x16xf32>
    %c0_2 = arith.constant 0 : index
    %c0_3 = arith.constant 0 : index
    %c0_4 = arith.constant 0 : index
    %1 = vector.load %arg2[%c0_2, %c0_3, %c0_4] : memref<2x16x8xf32, #tpu.memory_space<vmem>>, vector<2x16x8xf32>
    %cst = arith.constant dense<0.000000e+00> : vector<2x16xf32>
    %2 = vector.multi_reduction <add>, %0, %cst [2] : vector<2x16x16xf32> to vector<2x16xf32>
    %3 = vector.shape_cast %2 : vector<2x16xf32> to vector<2x16x1xf32>
    %cst_5 = arith.constant 1.000000e+00 : f32
    %4 = vector.broadcast %cst_5 : f32 to vector<2x16x1xf32>
    %5 = arith.addf %3, %4 : vector<2x16x1xf32>
    %6 = math.rsqrt %5 : vector<2x16x1xf32>
    %7 = vector.shape_cast %1 : vector<2x16x8xf32> to vector<32x8xf32>
    %c0_6 = arith.constant 0 : index
    %c0_7 = arith.constant 0 : index
    %8 = vector.load %arg3[%c0_6, %c0_7] : memref<8x32xf32, #tpu.memory_space<vmem>>, vector<8x32xf32>
    %cst_8 = arith.constant dense<0.000000e+00> : vector<32x32xf32>
    %9 = tpu.matmul %7, %8, %cst_8 {dimension_numbers = #tpu.dot_dimension_numbers<[1], [0], [0], [1], [0, 0, 1, 1], [], []>} : vector<32x8xf32>, vector<8x32xf32>, vector<32x32xf32> -> vector<32x32xf32>
    %10 = vector.shape_cast %9 : vector<32x32xf32> to vector<2x16x32xf32>
    %11 = vector.broadcast %6 : vector<2x16x1xf32> to vector<2x16x32xf32>
    %12 = arith.mulf %11, %10 : vector<2x16x32xf32>
    "tpu.trace_start"() <{level = 10 : i32, message = "bij,bjh->bih"}> : () -> ()
    %cst_9 = arith.constant dense<0.000000e+00> : vector<2x16x32xf32>
    %13 = tpu.matmul %0, %12, %cst_9 {dimension_numbers = #tpu.dot_dimension_numbers<[2], [1], [1], [2], [0, 0, 0, 1, 1, 2], [0], [0]>} : vector<2x16x16xf32>, vector<2x16x32xf32>, vector<2x16x32xf32> -> vector<2x16x32xf32>
    "tpu.trace_stop"() : () -> ()
    %14 = arith.addf %13, %12 : vector<2x16x32xf32>
    %15 = vector.broadcast %6 : vector<2x16x1xf32> to vector<2x16x32xf32>
    %16 = arith.mulf %15, %14 : vector<2x16x32xf32>
    %c0_10 = arith.constant 0 : index
    %c0_11 = arith.constant 0 : index
    %17 = vector.load %arg4[%c0_10, %c0_11] : memref<1x32xf32, #tpu.memory_space<vmem>>, vector<1x32xf32>
    %18 = vector.shape_cast %17 : vector<1x32xf32> to vector<1x1x32xf32>
    %19 = vector.broadcast %18 : vector<1x1x32xf32> to vector<2x16x32xf32>
    %20 = arith.addf %16, %19 : vector<2x16x32xf32>
    %cst_12 = arith.constant 0.000000e+00 : f32
    %21 = vector.broadcast %cst_12 : f32 to vector<2x16x32xf32>
    %22 = arith.maximumf %20, %21 : vector<2x16x32xf32>
    %23 = vector.shape_cast %22 : vector<2x16x32xf32> to vector<32x32xf32>
    %c0_13 = arith.constant 0 : index
    %c0_14 = arith.constant 0 : index
    %24 = vector.load %arg5[%c0_13, %c0_14] : memref<32x32xf32, #tpu.memory_space<vmem>>, vector<32x32xf32>
    %cst_15 = arith.constant dense<0.000000e+00> : vector<32x32xf32>
    %25 = tpu.matmul %23, %24, %cst_15 {dimension_numbers = #tpu.dot_dimension_numbers<[1], [0], [0], [1], [0, 0, 1, 1], [], []>} : vector<32x32xf32>, vector<32x32xf32>, vector<32x32xf32> -> vector<32x32xf32>
    %26 = vector.shape_cast %25 : vector<32x32xf32> to vector<2x16x32xf32>
    %27 = vector.broadcast %6 : vector<2x16x1xf32> to vector<2x16x32xf32>
    %28 = arith.mulf %27, %26 : vector<2x16x32xf32>
    "tpu.trace_start"() <{level = 10 : i32, message = "bij,bjh->bih"}> : () -> ()
    %cst_16 = arith.constant dense<0.000000e+00> : vector<2x16x32xf32>
    %29 = tpu.matmul %0, %28, %cst_16 {dimension_numbers = #tpu.dot_dimension_numbers<[2], [1], [1], [2], [0, 0, 0, 1, 1, 2], [0], [0]>} : vector<2x16x16xf32>, vector<2x16x32xf32>, vector<2x16x32xf32> -> vector<2x16x32xf32>
    "tpu.trace_stop"() : () -> ()
    %30 = arith.addf %29, %28 : vector<2x16x32xf32>
    %31 = vector.broadcast %6 : vector<2x16x1xf32> to vector<2x16x32xf32>
    %32 = arith.mulf %31, %30 : vector<2x16x32xf32>
    %c0_17 = arith.constant 0 : index
    %c0_18 = arith.constant 0 : index
    %33 = vector.load %arg6[%c0_17, %c0_18] : memref<1x32xf32, #tpu.memory_space<vmem>>, vector<1x32xf32>
    %34 = vector.shape_cast %33 : vector<1x32xf32> to vector<1x1x32xf32>
    %35 = vector.broadcast %34 : vector<1x1x32xf32> to vector<2x16x32xf32>
    %36 = arith.addf %32, %35 : vector<2x16x32xf32>
    %cst_19 = arith.constant 0.000000e+00 : f32
    %37 = vector.broadcast %cst_19 : f32 to vector<2x16x32xf32>
    %38 = arith.maximumf %36, %37 : vector<2x16x32xf32>
    %cst_20 = arith.constant dense<0.000000e+00> : vector<2x32xf32>
    %39 = vector.multi_reduction <add>, %38, %cst_20 [1] : vector<2x16x32xf32> to vector<2x32xf32>
    %40 = vector.shape_cast %39 : vector<2x32xf32> to vector<2x1x32xf32>
    %cst_21 = arith.constant 6.250000e-02 : f32
    %41 = vector.broadcast %cst_21 : f32 to vector<2x1x32xf32>
    %42 = arith.mulf %40, %41 : vector<2x1x32xf32>
    %c0_22 = arith.constant 0 : index
    %c0_23 = arith.constant 0 : index
    %c0_24 = arith.constant 0 : index
    %43 = vector.load %arg7[%c0_22, %c0_23, %c0_24] : memref<2x1x32xf32, #tpu.memory_space<vmem>>, vector<2x1x32xf32>
    tpu.vector_store %arg7[%c0_22, %c0_23, %c0_24], %42 {strides = array<i32>} : memref<2x1x32xf32, #tpu.memory_space<vmem>>, vector<2x1x32xf32>,
    return
  }
  func.func @transform_0(%arg0: i32) -> (i32, i32, i32) {
    %c0_i32 = arith.constant 0 : i32
    %c0_i32_0 = arith.constant 0 : i32
    %c0_i32_1 = arith.constant 0 : i32
    return %arg0, %c0_i32, %c0_i32_0 : i32, i32, i32
  }
  func.func @transform_1(%arg0: i32) -> (i32, i32, i32) {
    %c0_i32 = arith.constant 0 : i32
    %c0_i32_0 = arith.constant 0 : i32
    %c0_i32_1 = arith.constant 0 : i32
    return %arg0, %c0_i32, %c0_i32_0 : i32, i32, i32
  }
  func.func @transform_2(%arg0: i32) -> (i32, i32) {
    %c0_i32 = arith.constant 0 : i32
    %c0_i32_0 = arith.constant 0 : i32
    %c0_i32_1 = arith.constant 0 : i32
    return %c0_i32, %c0_i32_0 : i32, i32
  }
  func.func @transform_3(%arg0: i32) -> (i32, i32) {
    %c0_i32 = arith.constant 0 : i32
    %c0_i32_0 = arith.constant 0 : i32
    %c0_i32_1 = arith.constant 0 : i32
    return %c0_i32, %c0_i32_0 : i32, i32
  }
  func.func @transform_4(%arg0: i32) -> (i32, i32) {
    %c0_i32 = arith.constant 0 : i32
    %c0_i32_0 = arith.constant 0 : i32
    %c0_i32_1 = arith.constant 0 : i32
    return %c0_i32, %c0_i32_0 : i32, i32
  }
  func.func @transform_5(%arg0: i32) -> (i32, i32) {
    %c0_i32 = arith.constant 0 : i32
    %c0_i32_0 = arith.constant 0 : i32
    %c0_i32_1 = arith.constant 0 : i32
    return %c0_i32, %c0_i32_0 : i32, i32
  }
  func.func @transform_6(%arg0: i32) -> (i32, i32, i32) {
    %c0_i32 = arith.constant 0 : i32
    %c0_i32_0 = arith.constant 0 : i32
    %c0_i32_1 = arith.constant 0 : i32
    return %arg0, %c0_i32, %c0_i32_0 : i32, i32, i32
  }
}

</mosaic_0001>

<llo_original>
// kernel: tpu_custom_call.1
$region0: #{tpu_custom_call.1}
  #allocation0 [shape = 'u32[]', space=smem, size = 0x4, offset = 0x4, fixed_abs, tag = 'smem constant byte address 0x4 - core index']
  #allocation1 [shape = 'u32[72,128]{1,0:T(1,128)}', space=vmem, size = 0x9000, scoped, tag = 'internal scratch']
  %s0 = inlined_call_operand.vmem [shape: f32[4,16,16], index: 0, kind: input, shape index: {}]
  %s1 = inlined_call_operand.vmem [shape: f32[4,16,8], index: 1, kind: input, shape index: {}]
  %s2 = inlined_call_operand.hbm [shape: f32[8,32], index: 2, kind: input, shape index: {}]
  %s3 = inlined_call_operand.vmem [shape: f32[1,32], index: 3, kind: input, shape index: {}]
  %s4 = inlined_call_operand.vmem [shape: f32[32,32], index: 4, kind: input, shape index: {}]
  %s5 = inlined_call_operand.vmem [shape: f32[1,32], index: 5, kind: input, shape index: {}]
  %s6 = inlined_call_operand.hbm [shape: f32[4,1,32], index: 6, kind: output, shape index: {}]
  %s7 = sld [smem:[#allocation0]]
  $region61: #{tpu_custom_call.1} parent=0
    _
  %s9 = ssub.s32 1, %s7
  %s10 = scalar_select 0, %s9, %s7
  $region1: #{tpu_custom_call.1} parent=0
    #allocation2 [shape = 'u8[4096]{0}', space=vmem, size = 0x1000, scoped, tag = 'input window, operand 2, single buffered']
    #allocation3 [shape = 's32[2]{0}', space=sflag, size = 0x8, scoped, tag = 'scoped memory for tpu_custom_call.1']
    #allocation4 [shape = 's32[2]{0}', space=sflag, size = 0x8, scoped, tag = 'scoped memory for tpu_custom_call.1']
    #allocation5 [shape = 'u8[2048]{0}', space=vmem, size = 0x800, scoped, tag = 'output window, operand 0']
    %11 = vsyncpa [#allocation3], 0
    %12 = vsyncpa [#allocation4], 0
    %s13 = scalar_lea.sflag [#allocation4], 1
    %14 = vsyncpa %s13, 0
    loop: start=0, step=1, limit=4
    $region2: #{tpu_custom_call.1} parent=1 // loop_pre_header
      _
    $region3: #{tpu_custom_call.1} parent=1 // loop_header
      %s16 = sphi 0, %s20
      %p17 = scmp.ge.s32.totalorder %s16, 4
      %s26 = sphi 0, %s28
      %s29 = sphi 0, %s26
      %s30 = sphi 0, %s29
      %s46 = sphi 0, %s30
      %s52 = sphi 0, %s54
      %s55 = sphi 0, %s52
      %s56 = sphi 0, %s55
      %s72 = sphi 0, %s56
      %s76 = sphi 0, %s76
      %s78 = sphi 0, %s76
      %s79 = sphi 0, %s78
      %s93 = sphi 0, %s79
      %s97 = sphi 0, %s97
      %s99 = sphi 0, %s97
      %s100 = sphi 0, %s99
      %s114 = sphi 0, %s100
      %s118 = sphi 0, %s118
      %s120 = sphi 0, %s118
      %s121 = sphi 0, %s120
      %s135 = sphi 0, %s121
      %s139 = sphi 0, %s139
      %s141 = sphi 0, %s139
      %s142 = sphi 0, %s141
      %s156 = sphi 0, %s142
      %s162 = sphi 0, %s164
      %s165 = sphi 0, %s162
      %s166 = sphi 0, %s165
      %s182 = sphi 0, %s166
    $region4: #{tpu_custom_call.1} parent=1 // loop_header_branch
      %19 = sbr.rel (%p17) target = $region8
    $region5: #{tpu_custom_call.1} parent=1 // loop_body
      %s21 = ssub.s32 %s16, 1
      %s22 = ssub.s32 %s16, 2
      %s23 = sadd.s32 %s16, 1
      %s24 = ssub.s32 %s16, %s23
      %p25 = scmp.eq.s32.totalorder %s24, 0
      %s27 = sadd.s32 %s26, 1
      %s28 = scalar_select %p25, %s26, %s27
      %p31 = pneg %p25
      %p32 = scmp.eq.s32.totalorder %s16, 1
      %p33 = por %p31, %p32
      %p34 = scmp.ne.s32.totalorder %s26, %s29
      %p35 = scmp.eq.s32.totalorder %s16, 0
      %p36 = por %p34, %p35
      %p37 = scmp.ne.s32.totalorder %s26, %s29
      %p38 = scmp.eq.s32.totalorder %s21, 1
      %p39 = por %p37, %p38
      %p40 = scmp.ne.s32.totalorder %s29, %s30
      %p41 = scmp.eq.s32.totalorder %s21, 0
      %p42 = por %p40, %p41
      %p43 = scmp.ne.s32.totalorder %s29, %s30
      %p44 = scmp.eq.s32.totalorder %s22, 1
      %p45 = por %p43, %p44
      %p47 = scmp.ne.s32.totalorder %s30, %s46
      %p48 = scmp.eq.s32.totalorder %s22, 0
      %p49 = por %p47, %p48
      %s50 = ssub.s32 %s16, %s23
      %p51 = scmp.eq.s32.totalorder %s50, 0
      %s53 = sadd.s32 %s52, 1
      %s54 = scalar_select %p51, %s52, %s53
      %p57 = pneg %p51
      %p58 = scmp.eq.s32.totalorder %s16, 1
      %p59 = por %p57, %p58
      %p60 = scmp.ne.s32.totalorder %s52, %s55
      %p61 = scmp.eq.s32.totalorder %s16, 0
      %p62 = por %p60, %p61
      %p63 = scmp.ne.s32.totalorder %s52, %s55
      %p64 = scmp.eq.s32.totalorder %s21, 1
      %p65 = por %p63, %p64
      %p66 = scmp.ne.s32.totalorder %s55, %s56
      %p67 = scmp.eq.s32.totalorder %s21, 0
      %p68 = por %p66, %p67
      %p69 = scmp.ne.s32.totalorder %s55, %s56
      %p70 = scmp.eq.s32.totalorder %s22, 1
      %p71 = por %p69, %p70
      %p73 = scmp.ne.s32.totalorder %s56, %s72
      %p74 = scmp.eq.s32.totalorder %s22, 0
      %p75 = por %p73, %p74
      %s77 = sadd.s32 %s76, 1
      %p80 = scmp.eq.s32.totalorder %s16, 1
      %p81 = scmp.ne.s32.totalorder %s76, %s78
      %p82 = scmp.eq.s32.totalorder %s16, 0
      %p83 = por %p81, %p82
      %p84 = scmp.ne.s32.totalorder %s76, %s78
      %p85 = scmp.eq.s32.totalorder %s21, 1
      %p86 = por %p84, %p85
      %p87 = scmp.ne.s32.totalorder %s78, %s79
      %p88 = scmp.eq.s32.totalorder %s21, 0
      %p89 = por %p87, %p88
      %p90 = scmp.ne.s32.totalorder %s78, %s79
      %p91 = scmp.eq.s32.totalorder %s22, 1
      %p92 = por %p90, %p91
      %p94 = scmp.ne.s32.totalorder %s79, %s93
      %p95 = scmp.eq.s32.totalorder %s22, 0
      %p96 = por %p94, %p95
      %s98 = sadd.s32 %s97, 1
      %p101 = scmp.eq.s32.totalorder %s16, 1
      %p102 = scmp.ne.s32.totalorder %s97, %s99
      %p103 = scmp.eq.s32.totalorder %s16, 0
      %p104 = por %p102, %p103
      %p105 = scmp.ne.s32.totalorder %s97, %s99
      %p106 = scmp.eq.s32.totalorder %s21, 1
      %p107 = por %p105, %p106
      %p108 = scmp.ne.s32.totalorder %s99, %s100
      %p109 = scmp.eq.s32.totalorder %s21, 0
      %p110 = por %p108, %p109
      %p111 = scmp.ne.s32.totalorder %s99, %s100
      %p112 = scmp.eq.s32.totalorder %s22, 1
      %p113 = por %p111, %p112
      %p115 = scmp.ne.s32.totalorder %s100, %s114
      %p116 = scmp.eq.s32.totalorder %s22, 0
      %p117 = por %p115, %p116
      %s119 = sadd.s32 %s118, 1
      %p122 = scmp.eq.s32.totalorder %s16, 1
      %p123 = scmp.ne.s32.totalorder %s118, %s120
      %p124 = scmp.eq.s32.totalorder %s16, 0
      %p125 = por %p123, %p124
      %p126 = scmp.ne.s32.totalorder %s118, %s120
      %p127 = scmp.eq.s32.totalorder %s21, 1
      %p128 = por %p126, %p127
      %p129 = scmp.ne.s32.totalorder %s120, %s121
      %p130 = scmp.eq.s32.totalorder %s21, 0
      %p131 = por %p129, %p130
      %p132 = scmp.ne.s32.totalorder %s120, %s121
      %p133 = scmp.eq.s32.totalorder %s22, 1
      %p134 = por %p132, %p133
      %p136 = scmp.ne.s32.totalorder %s121, %s135
      %p137 = scmp.eq.s32.totalorder %s22, 0
      %p138 = por %p136, %p137
      %s140 = sadd.s32 %s139, 1
      %p143 = scmp.eq.s32.totalorder %s16, 1
      %p144 = scmp.ne.s32.totalorder %s139, %s141
      %p145 = scmp.eq.s32.totalorder %s16, 0
      %p146 = por %p144, %p145
      %p147 = scmp.ne.s32.totalorder %s139, %s141
      %p148 = scmp.eq.s32.totalorder %s21, 1
      %p149 = por %p147, %p148
      %p150 = scmp.ne.s32.totalorder %s141, %s142
      %p151 = scmp.eq.s32.totalorder %s21, 0
      %p152 = por %p150, %p151
      %p153 = scmp.ne.s32.totalorder %s141, %s142
      %p154 = scmp.eq.s32.totalorder %s22, 1
      %p155 = por %p153, %p154
      %p157 = scmp.ne.s32.totalorder %s142, %s156
      %p158 = scmp.eq.s32.totalorder %s22, 0
      %p159 = por %p157, %p158
      %s160 = ssub.s32 %s16, %s23
      %p161 = scmp.eq.s32.totalorder %s160, 0
      %s163 = sadd.s32 %s162, 1
      %s164 = scalar_select %p161, %s162, %s163
      %p167 = pneg %p161
      %p168 = scmp.eq.s32.totalorder %s16, 1
      %p169 = por %p167, %p168
      %p170 = scmp.ne.s32.totalorder %s162, %s165
      %p171 = scmp.eq.s32.totalorder %s16, 0
      %p172 = por %p170, %p171
      %p173 = scmp.ne.s32.totalorder %s162, %s165
      %p174 = scmp.eq.s32.totalorder %s21, 1
      %p175 = por %p173, %p174
      %p176 = scmp.ne.s32.totalorder %s165, %s166
      %p177 = scmp.eq.s32.totalorder %s21, 0
      %p178 = por %p176, %p177
      %p179 = scmp.ne.s32.totalorder %s165, %s166
      %p180 = scmp.eq.s32.totalorder %s22, 1
      %p181 = por %p179, %p180
      %p183 = scmp.ne.s32.totalorder %s166, %s182
      %p184 = scmp.eq.s32.totalorder %s22, 0
      %p185 = por %p183, %p184
      %p186 = scmp.le.s32.totalorder 1, %s16
      %p187 = scmp.lt.s32.totalorder %s16, 3
      %p188 = pnand %p186, %p187
      %p189 = pneg %p188
      // Predicated region
      $region9: #{tpu_custom_call.1} parent=5 // pred_check
        _
      $region10: #{tpu_custom_call.1} parent=5 // pred_check_branch
        %191 = sbr.rel (%p188) target = $region12
      $region11: #{tpu_custom_call.1} parent=5 // pred_region
        %s192 = ssub.s32 %s16, 1
        // Predicated region
        $region13: #{tpu_custom_call.1} parent=11 // pred_check
          %p193 = pneg %p89
        $region14: #{tpu_custom_call.1} parent=11 // pred_check_branch
          %195 = sbr.rel (%p193) target = $region16
        $region15: #{tpu_custom_call.1} parent=11 // pred_region
          %197 = vsyncadd [#allocation3], 0
          %s199 = sshll.u32 %s2, 4
          %s200 = int_to_ptr.hbm [resolvable:$true] %s199
          %s201 = sshll.u32 [#allocation2], 4
          %s202 = int_to_ptr.vmem [resolvable:$true] %s201
          %204 = dma.hbm_to_vmem [thread:$0]  %s200, 128, %s202, [#allocation3]
        $region16: #{tpu_custom_call.1} parent=11 // pred_fallthru
          _
        // Predicated region
        $region17: #{tpu_custom_call.1} parent=11 // pred_check
          %p205 = pneg %p110
        $region18: #{tpu_custom_call.1} parent=11 // pred_check_branch
          %207 = sbr.rel (%p205) target = $region20
        $region19: #{tpu_custom_call.1} parent=11 // pred_region
          _
        $region20: #{tpu_custom_call.1} parent=11 // pred_fallthru
          _
        // Predicated region
        $region21: #{tpu_custom_call.1} parent=11 // pred_check
          %p208 = pneg %p131
        $region22: #{tpu_custom_call.1} parent=11 // pred_check_branch
          %210 = sbr.rel (%p208) target = $region24
        $region23: #{tpu_custom_call.1} parent=11 // pred_region
          _
        $region24: #{tpu_custom_call.1} parent=11 // pred_fallthru
          _
        // Predicated region
        $region25: #{tpu_custom_call.1} parent=11 // pred_check
          %p211 = pneg %p152
        $region26: #{tpu_custom_call.1} parent=11 // pred_check_branch
          %213 = sbr.rel (%p211) target = $region28
        $region27: #{tpu_custom_call.1} parent=11 // pred_region
          _
        $region28: #{tpu_custom_call.1} parent=11 // pred_fallthru
          _
      $region12: #{tpu_custom_call.1} parent=5 // pred_fallthru
        _
      %p214 = scmp.lt.s32.totalorder %s16, 2
      // Predicated region
      $region29: #{tpu_custom_call.1} parent=5 // pred_check
        %p215 = pneg %p214
      $region30: #{tpu_custom_call.1} parent=5 // pred_check_branch
        %217 = sbr.rel (%p215) target = $region32
      $region31: #{tpu_custom_call.1} parent=5 // pred_region
        // Predicated region
        $region33: #{tpu_custom_call.1} parent=31 // pred_check
          %p218 = pneg %p36
        $region34: #{tpu_custom_call.1} parent=31 // pred_check_branch
          %220 = sbr.rel (%p218) target = $region36
        $region35: #{tpu_custom_call.1} parent=31 // pred_region
          %s221 = smul.u32 2, %s16
          %p222 = scmp.lt.s32.totalorder %s221, 3
          %s223 = scalar_select %p222, %s221, 3
          %s224 = smul.addr %s223, 2
          %s225 = smul.addr %s224, 8
          %s226 = scalar_lea.vmem %s0, %s225
          %s227 = smul.u32 2, %s16
        $region36: #{tpu_custom_call.1} parent=31 // pred_fallthru
          _
        // Predicated region
        $region37: #{tpu_custom_call.1} parent=31 // pred_check
          %p228 = pneg %p62
        $region38: #{tpu_custom_call.1} parent=31 // pred_check_branch
          %230 = sbr.rel (%p228) target = $region40
        $region39: #{tpu_custom_call.1} parent=31 // pred_region
          %s231 = smul.u32 2, %s16
          %p232 = scmp.lt.s32.totalorder %s231, 3
          %s233 = scalar_select %p232, %s231, 3
          %s234 = smul.addr %s233, 2
          %s235 = smul.addr %s234, 8
          %s236 = scalar_lea.vmem %s1, %s235
          %s237 = smul.u32 2, %s16
        $region40: #{tpu_custom_call.1} parent=31 // pred_fallthru
          _
      $region32: #{tpu_custom_call.1} parent=5 // pred_fallthru
        _
      %p238 = scmp.le.s32.totalorder 1, %s16
      %p239 = scmp.lt.s32.totalorder %s16, 3
      %p240 = pnand %p238, %p239
      %p241 = pneg %p240
      // Predicated region
      $region41: #{tpu_custom_call.1} parent=5 // pred_check
        _
      $region42: #{tpu_custom_call.1} parent=5 // pred_check_branch
        %243 = sbr.rel (%p240) target = $region44
      $region43: #{tpu_custom_call.1} parent=5 // pred_region
        %s244 = ssub.s32 %s16, 1
        // Predicated region
        $region45: #{tpu_custom_call.1} parent=43 // pred_check
          %p245 = pneg %p89
        $region46: #{tpu_custom_call.1} parent=43 // pred_check_branch
          %247 = sbr.rel (%p245) target = $region48
        $region47: #{tpu_custom_call.1} parent=43 // pred_region
          %249 = dma.done [#allocation3], 128
        $region48: #{tpu_custom_call.1} parent=43 // pred_fallthru
          _
        %s250 = smul.u32 2, %s21
        %p251 = scmp.lt.s32.totalorder %s250, 3
        %s252 = scalar_select %p251, %s250, 3
        %s253 = smul.addr %s252, 2
        %s254 = smul.addr %s253, 8
        %s255 = scalar_lea.vmem %s0, %s254
        %p256 = pneg %p42
        %p257 = pneg %p39
        %s258 = smul.u32 2, %s21
        %p259 = scmp.lt.s32.totalorder %s258, 3
        %s260 = scalar_select %p259, %s258, 3
        %s261 = smul.addr %s260, 2
        %s262 = smul.addr %s261, 8
        %s263 = scalar_lea.vmem %s1, %s262
        %p264 = pneg %p68
        %p265 = pneg %p65
        %p266 = pneg %p89
        %p267 = pneg %p86
        %p268 = pneg %p110
        %p269 = pneg %p107
        %p270 = pneg %p131
        %p271 = pneg %p128
        %p272 = pneg %p152
        %p273 = pneg %p149
        %p274 = pneg %p178
        %p275 = pneg %p175
        %s276 = sand.u32 %s165, 1
        %s277 = scalar_lea.sflag [#allocation4], %s276
        %s278 = sand.u32 %s165, 1
        %s279 = smul.addr %s278, 2
        %s280 = scalar_lea.vmem [#allocation5], %s279
        %s281 = smul.u32 2, %s21
        %p282 = scmp.lt.s32.totalorder %s281, 3
        %s283 = scalar_select %p282, %s281, 3
        %s284 = smul.addr %s283, 2
        %s285 = smul.addr %s284, 8
        %s286 = scalar_lea.vmem %s0, %s285
        %s287 = smul.u32 2, %s21
        %s288 = smul.u32 2, %s21
        %p289 = scmp.lt.s32.totalorder %s288, 3
        %s290 = scalar_select %p289, %s288, 3
        %s291 = smul.addr %s290, 2
        %s292 = smul.addr %s291, 8
        %s293 = scalar_lea.vmem %s1, %s292
        %s294 = smul.u32 2, %s21
        %s295 = smul.u32 2, %s21
        %v296 = vld [vmem:[%s286] sm:$0xff]
        %v297 = vld [vmem:[%s286 + $0x8] sm:$0xff]
        %v298 = vld [vmem:[%s286 + $0x10] sm:$0xff]
        %v299 = vld [vmem:[%s286 + $0x18] sm:$0xff]
        %v300 = vld [vmem:[%s293] sm:$0xff]
        %v301 = vld [vmem:[%s293 + $0x8] sm:$0xff]
        %v302 = vld [vmem:[%s293 + $0x10] sm:$0xff]
        %v303 = vld [vmem:[%s293 + $0x18] sm:$0xff]
        %vm304 = vcmask 130048
        %v305 = vsel %vm304, %v296, 0.0
        %306 = vadd.xlane.f32.xlu0 %v305
        %v307 = vpop.xlane.xlu0 %306
        %v308 = vsel %vm304, %v297, 0.0
        %309 = vadd.xlane.f32.xlu0 %v308
        %v310 = vpop.xlane.xlu0 %309
        %v311 = vsel %vm304, %v298, 0.0
        %312 = vadd.xlane.f32.xlu0 %v311
        %v313 = vpop.xlane.xlu0 %312
        %v314 = vsel %vm304, %v299, 0.0
        %315 = vadd.xlane.f32.xlu0 %v314
        %v316 = vpop.xlane.xlu0 %315
        %v317 = vadd.f32 %v307, 1.0
        %v318 = vadd.f32 %v310, 1.0
        %v319 = vadd.f32 %v313, 1.0
        %v320 = vadd.f32 %v316, 1.0
        %v321 = vrsqrt.pop %v317
        %v322 = vmul.f32 %v321, %v317
        %v323 = vmul.f32 %v322, %v321
        %v324 = vmul.f32 0.5, %v323
        %v325 = vsub.f32 1.5, %v324
        %v326 = vmul.f32 %v321, %v325
        %vm327 = vweird.f32 %v317
        %vm328 = vweird.f32 %v321
        %vm329 = vmor %vm327, %vm328
        %v330 = vsel %vm329, %v321, %v326
        %v331 = vrsqrt.pop %v318
        %v332 = vmul.f32 %v331, %v318
        %v333 = vmul.f32 %v332, %v331
        %v334 = vmul.f32 0.5, %v333
        %v335 = vsub.f32 1.5, %v334
        %v336 = vmul.f32 %v331, %v335
        %vm337 = vweird.f32 %v318
        %vm338 = vweird.f32 %v331
        %vm339 = vmor %vm337, %vm338
        %v340 = vsel %vm339, %v331, %v336
        %v341 = vrsqrt.pop %v319
        %v342 = vmul.f32 %v341, %v319
        %v343 = vmul.f32 %v342, %v341
        %v344 = vmul.f32 0.5, %v343
        %v345 = vsub.f32 1.5, %v344
        %v346 = vmul.f32 %v341, %v345
        %vm347 = vweird.f32 %v319
        %vm348 = vweird.f32 %v341
        %vm349 = vmor %vm347, %vm348
        %v350 = vsel %vm349, %v341, %v346
        %v351 = vrsqrt.pop %v320
        %v352 = vmul.f32 %v351, %v320
        %v353 = vmul.f32 %v352, %v351
        %v354 = vmul.f32 0.5, %v353
        %v355 = vsub.f32 1.5, %v354
        %v356 = vmul.f32 %v351, %v355
        %vm357 = vweird.f32 %v320
        %vm358 = vweird.f32 %v351
        %vm359 = vmor %vm357, %vm358
        %v360 = vsel %vm359, %v351, %v356
        %v361 = vld [vmem:[#allocation2] sm:$0xff]
        %vm362 = vcmask 64512
        %v364 = vsel %vm362, %v300, 0
        %v367 = vsel %vm362, %v301, 0
        %v370 = vsel %vm362, %v302, 0
        %v373 = vsel %vm362, %v303, 0
        %375 = vmatpush.msra.mxu0 0.0
        %376 = vmatpush.msra.mxu0 0.0
        %377 = vmatpush.msra.mxu0 0.0
        %378 = vmatpush.msra.mxu0 0.0
        %379 = vmatpush.msra.mxu0 0.0
        %380 = vmatpush.msra.mxu0 0.0
        %381 = vmatpush.msra.mxu0 0.0
        %382 = vmatpush.msra.mxu0 0.0
        %383 = vmatpush.msra.mxu0 0.0
        %384 = vmatpush.msra.mxu0 0.0
        %385 = vmatpush.msra.mxu0 0.0
        %386 = vmatpush.msra.mxu0 0.0
        %387 = vmatpush.msra.mxu0 0.0
        %388 = vmatpush.msra.mxu0 0.0
        %389 = vmatpush.msra.mxu0 0.0
        %390 = vmatpush.msra.mxu0 %v361
        %391 = vmatmul.f32.gmra.mxu0 %v364
        %v392 = vpop.f32.mrf.mxu0
        %v393 = vadd.f32 0.0, %v392
        %394 = vmatmul.f32.gmra.mxu0 %v367
        %v395 = vpop.f32.mrf.mxu0
        %v396 = vadd.f32 0.0, %v395
        %397 = vmatmul.f32.gmra.mxu0 %v370
        %v398 = vpop.f32.mrf.mxu0
        %v399 = vadd.f32 0.0, %v398
        %400 = vmatmul.f32.gmra.mxu0 %v373
        %v401 = vpop.f32.mrf.mxu0
        %v402 = vadd.f32 0.0, %v401
        %403 = vdwg.mxu0
        %v404 = vmul.f32 %v330, %v393
        %v405 = vmul.f32 %v340, %v396
        %v406 = vmul.f32 %v350, %v399
        %v407 = vmul.f32 %v360, %v402
        %v409 = vsel %vm304, %v296, 0
        %v412 = vsel %vm304, %v297, 0
        %414 = vmatpush.msra.mxu0 0.0
        %415 = vmatpush.msra.mxu0 0.0
        %416 = vmatpush.msra.mxu0 0.0
        %417 = vmatpush.msra.mxu0 0.0
        %418 = vmatpush.msra.mxu0 0.0
        %419 = vmatpush.msra.mxu0 0.0
        %420 = vmatpush.msra.mxu0 0.0
        %421 = vmatpush.msra.mxu0 0.0
        %422 = vmatpush.msra.mxu0 0.0
        %423 = vmatpush.msra.mxu0 0.0
        %424 = vmatpush.msra.mxu0 0.0
        %425 = vmatpush.msra.mxu0 0.0
        %426 = vmatpush.msra.mxu0 0.0
        %427 = vmatpush.msra.mxu0 0.0
        %428 = vmatpush.msra.mxu0 %v405
        %429 = vmatpush.msra.mxu0 %v404
        %430 = vmatmul.f32.gmra.mxu0 %v409
        %v431 = vpop.f32.mrf.mxu0
        %v432 = vadd.f32 %v404, %v431
        %433 = vmatmul.f32.gmra.mxu0 %v412
        %v434 = vpop.f32.mrf.mxu0
        %v435 = vadd.f32 %v405, %v434
        %436 = vdwg.mxu0
        %v438 = vsel %vm304, %v298, 0
        %v441 = vsel %vm304, %v299, 0
        %443 = vmatpush.msra.mxu0 0.0
        %444 = vmatpush.msra.mxu0 0.0
        %445 = vmatpush.msra.mxu0 0.0
        %446 = vmatpush.msra.mxu0 0.0
        %447 = vmatpush.msra.mxu0 0.0
        %448 = vmatpush.msra.mxu0 0.0
        %449 = vmatpush.msra.mxu0 0.0
        %450 = vmatpush.msra.mxu0 0.0
        %451 = vmatpush.msra.mxu0 0.0
        %452 = vmatpush.msra.mxu0 0.0
        %453 = vmatpush.msra.mxu0 0.0
        %454 = vmatpush.msra.mxu0 0.0
        %455 = vmatpush.msra.mxu0 0.0
        %456 = vmatpush.msra.mxu0 0.0
        %457 = vmatpush.msra.mxu0 %v407
        %458 = vmatpush.msra.mxu0 %v406
        %459 = vmatmul.f32.gmra.mxu0 %v438
        %v460 = vpop.f32.mrf.mxu0
        %v461 = vadd.f32 %v406, %v460
        %462 = vmatmul.f32.gmra.mxu0 %v441
        %v463 = vpop.f32.mrf.mxu0
        %v464 = vadd.f32 %v407, %v463
        %465 = vdwg.mxu0
        %v466 = vmul.f32 %v330, %v432
        %v467 = vmul.f32 %v340, %v435
        %v468 = vmul.f32 %v350, %v461
        %v469 = vmul.f32 %v360, %v464
        %v470 = vld [vmem:[%s3] sm:$0x1]
        %v472 = vperm.slane %v470, 0
        %v474 = vadd.f32 %v466, %v472
        %v475 = vadd.f32 %v467, %v472
        %v476 = vadd.f32 %v468, %v472
        %v477 = vadd.f32 %v469, %v472
        %v478 = vmax.f32 %v474, 0.0
        %v479 = vmax.f32 %v475, 0.0
        %v480 = vmax.f32 %v476, 0.0
        %v481 = vmax.f32 %v477, 0.0
        %v482 = vld [vmem:[%s4] sm:$0xff]
        %v483 = vld [vmem:[%s4 + $0x8] sm:$0xff]
        %v484 = vld [vmem:[%s4 + $0x10] sm:$0xff]
        %v485 = vld [vmem:[%s4 + $0x18] sm:$0xff]
        %vm486 = vcmask 261120
        %v488 = vsel %vm486, %v478, 0
        %v491 = vsel %vm486, %v479, 0
        %v494 = vsel %vm486, %v480, 0
        %v497 = vsel %vm486, %v481, 0
        %499 = vmatpush.msra.mxu0 0.0
        %500 = vmatpush.msra.mxu0 0.0
        %501 = vmatpush.msra.mxu0 0.0
        %502 = vmatpush.msra.mxu0 0.0
        %503 = vmatpush.msra.mxu0 0.0
        %504 = vmatpush.msra.mxu0 0.0
        %505 = vmatpush.msra.mxu0 0.0
        %506 = vmatpush.msra.mxu0 0.0
        %507 = vmatpush.msra.mxu0 0.0
        %508 = vmatpush.msra.mxu0 0.0
        %509 = vmatpush.msra.mxu0 0.0
        %510 = vmatpush.msra.mxu0 0.0
        %511 = vmatpush.msra.mxu0 %v485
        %512 = vmatpush.msra.mxu0 %v484
        %513 = vmatpush.msra.mxu0 %v483
        %514 = vmatpush.msra.mxu0 %v482
        %515 = vmatmul.f32.gmra.mxu0 %v488
        %v516 = vpop.f32.mrf.mxu0
        %v517 = vadd.f32 0.0, %v516
        %518 = vmatmul.f32.gmra.mxu0 %v491
        %v519 = vpop.f32.mrf.mxu0
        %v520 = vadd.f32 0.0, %v519
        %521 = vmatmul.f32.gmra.mxu0 %v494
        %v522 = vpop.f32.mrf.mxu0
        %v523 = vadd.f32 0.0, %v522
        %524 = vmatmul.f32.gmra.mxu0 %v497
        %v525 = vpop.f32.mrf.mxu0
        %v526 = vadd.f32 0.0, %v525
        %527 = vdwg.mxu0
        %v528 = vmul.f32 %v330, %v517
        %v529 = vmul.f32 %v340, %v520
        %v530 = vmul.f32 %v350, %v523
        %v531 = vmul.f32 %v360, %v526
        %532 = vmatpush.msra.mxu0 0.0
        %533 = vmatpush.msra.mxu0 0.0
        %534 = vmatpush.msra.mxu0 0.0
        %535 = vmatpush.msra.mxu0 0.0
        %536 = vmatpush.msra.mxu0 0.0
        %537 = vmatpush.msra.mxu0 0.0
        %538 = vmatpush.msra.mxu0 0.0
        %539 = vmatpush.msra.mxu0 0.0
        %540 = vmatpush.msra.mxu0 0.0
        %541 = vmatpush.msra.mxu0 0.0
        %542 = vmatpush.msra.mxu0 0.0
        %543 = vmatpush.msra.mxu0 0.0
        %544 = vmatpush.msra.mxu0 0.0
        %545 = vmatpush.msra.mxu0 0.0
        %546 = vmatpush.msra.mxu0 %v529
        %547 = vmatpush.msra.mxu0 %v528
        %548 = vmatmul.f32.gmra.mxu0 %v409
        %v549 = vpop.f32.mrf.mxu0
        %v550 = vadd.f32 %v528, %v549
        %551 = vmatmul.f32.gmra.mxu0 %v412
        %v552 = vpop.f32.mrf.mxu0
        %v553 = vadd.f32 %v529, %v552
        %554 = vdwg.mxu0
        %555 = vmatpush.msra.mxu0 0.0
        %556 = vmatpush.msra.mxu0 0.0
        %557 = vmatpush.msra.mxu0 0.0
        %558 = vmatpush.msra.mxu0 0.0
        %559 = vmatpush.msra.mxu0 0.0
        %560 = vmatpush.msra.mxu0 0.0
        %561 = vmatpush.msra.mxu0 0.0
        %562 = vmatpush.msra.mxu0 0.0
        %563 = vmatpush.msra.mxu0 0.0
        %564 = vmatpush.msra.mxu0 0.0
        %565 = vmatpush.msra.mxu0 0.0
        %566 = vmatpush.msra.mxu0 0.0
        %567 = vmatpush.msra.mxu0 0.0
        %568 = vmatpush.msra.mxu0 0.0
        %569 = vmatpush.msra.mxu0 %v531
        %570 = vmatpush.msra.mxu0 %v530
        %571 = vmatmul.f32.gmra.mxu0 %v438
        %v572 = vpop.f32.mrf.mxu0
        %v573 = vadd.f32 %v530, %v572
        %574 = vmatmul.f32.gmra.mxu0 %v441
        %v575 = vpop.f32.mrf.mxu0
        %v576 = vadd.f32 %v531, %v575
        %577 = vdwg.mxu0
        %v578 = vmul.f32 %v330, %v550
        %v579 = vmul.f32 %v340, %v553
        %v580 = vmul.f32 %v350, %v573
        %v581 = vmul.f32 %v360, %v576
        %v582 = vld [vmem:[%s5] sm:$0x1]
        %v584 = vperm.slane %v582, 0
        %v586 = vadd.f32 %v578, %v584
        %v587 = vadd.f32 %v579, %v584
        %v588 = vadd.f32 %v580, %v584
        %v589 = vadd.f32 %v581, %v584
        %v590 = vmax.f32 %v586, 0.0
        %v591 = vmax.f32 %v587, 0.0
        %v592 = vmax.f32 %v588, 0.0
        %v593 = vmax.f32 %v589, 0.0
        %v594 = vsel %vm486, %v590, 0.0
        %v595 = vsel %vm486, %v591, 0.0
        %v596 = vadd.f32 %v594, %v595
        %v597 = vrot.slane %v596, 4
        %v598 = vadd.f32 %v596, %v597
        %v599 = vrot.slane %v598, 2
        %v600 = vadd.f32 %v598, %v599
        %v601 = vrot.slane %v600, 1
        %v602 = vadd.f32 %v600, %v601
        %v603 = vsel %vm486, %v592, 0.0
        %v604 = vsel %vm486, %v593, 0.0
        %v605 = vadd.f32 %v603, %v604
        %v606 = vrot.slane %v605, 4
        %v607 = vadd.f32 %v605, %v606
        %v608 = vrot.slane %v607, 2
        %v609 = vadd.f32 %v607, %v608
        %v610 = vrot.slane %v609, 1
        %v611 = vadd.f32 %v609, %v610
        %v612 = vmul.f32 %v602, 0.0625
        %v613 = vmul.f32 %v611, 0.0625
        %vm614 = vcmask 253952
        %615 = vst.msk [vmem:[%s280] sm:$0x1] %vm614, %v612
        %616 = vst.msk [vmem:[%s280 + $0x1] sm:$0x1] %vm614, %v613
        %s617 = sand.u32 %s165, 1
        %s618 = scalar_lea.sflag [#allocation4], %s617
        %s619 = sand.u32 %s165, 1
        %s620 = smul.addr %s619, 2
        %s621 = scalar_lea.vmem [#allocation5], %s620
        // Predicated region
        $region49: #{tpu_custom_call.1} parent=43 // pred_check
          %p622 = pneg %p175
        $region50: #{tpu_custom_call.1} parent=43 // pred_check_branch
          %624 = sbr.rel (%p622) target = $region52
        $region51: #{tpu_custom_call.1} parent=43 // pred_region
          %s625 = smul.u32 2, %s21
          %627 = vsyncadd %s618, 0
          %s628 = scalar_lea.hbm %s6, %s625
          %s629 = sshll.u32 %s621, 4
          %s630 = int_to_ptr.vmem [resolvable:$true] %s629
          %s631 = sshll.u32 %s628, 4
          %s632 = int_to_ptr.hbm [resolvable:$true] %s631
          %637 = dma.vmem_to_hbm [thread:$0]  %s630, 32, %s632, %s618, 16, 16, 1
        $region52: #{tpu_custom_call.1} parent=43 // pred_fallthru
          _
      $region44: #{tpu_custom_call.1} parent=5 // pred_fallthru
        _
      %p638 = scmp.le.s32.totalorder 2, %s16
      // Predicated region
      $region53: #{tpu_custom_call.1} parent=5 // pred_check
        %p639 = pneg %p638
      $region54: #{tpu_custom_call.1} parent=5 // pred_check_branch
        %641 = sbr.rel (%p639) target = $region56
      $region55: #{tpu_custom_call.1} parent=5 // pred_region
        %s642 = ssub.s32 %s16, 2
        // Predicated region
        $region57: #{tpu_custom_call.1} parent=55 // pred_check
          %p643 = pneg %p181
        $region58: #{tpu_custom_call.1} parent=55 // pred_check_branch
          %645 = sbr.rel (%p643) target = $region60
        $region59: #{tpu_custom_call.1} parent=55 // pred_region
          %s646 = sand.u32 %s166, 1
          %s647 = scalar_lea.sflag [#allocation4], %s646
          %s648 = sand.u32 %s166, 1
          %s649 = smul.addr %s648, 2
          %s650 = scalar_lea.vmem [#allocation5], %s649
          %652 = dma.done %s647, 32
        $region60: #{tpu_custom_call.1} parent=55 // pred_fallthru
          _
      $region56: #{tpu_custom_call.1} parent=5 // pred_fallthru
        _
    $region6: #{tpu_custom_call.1} parent=1 // loop_footer
      %s20 = sadd.s32 1, %s16
    $region7: #{tpu_custom_call.1} parent=1 // loop_footer_branch
      %15 = sbr.rel target = $region3
    $region8: #{tpu_custom_call.1} parent=1 // loop_exit
      _
    %653 = vsyncpa [#allocation3], 1
    %s654 = scalar_lea.sflag [#allocation3], 1
    %655 = vsyncpa %s654, 1
    %656 = vsyncpa [#allocation4], 1
    %s657 = scalar_lea.sflag [#allocation4], 1
    %658 = vsyncpa %s657, 1

</llo_original>
